<compile_context>
chip_gen: v7x
topology: tpu7x:2x2x1
jax: 0.10.0
libtpu: 0.0.40
codegen_flags: <defaults>
</compile_context>

<pallas_src>
import functools

import jax
import jax.numpy as jnp
from jax.experimental import pallas as pl
from jax.experimental.pallas import tpu as pltpu

EMBED = 128
HIDDEN = 256          # net_arch = [256, 256]
POST = 32
N_HIDDEN_LAYERS = 4   # latent_policy (2 layers) + latent_policy2 (2 layers)


def _round_up(x, m):
    return (x + m - 1) // m * m


def critic_kernel(data_ref,                        # [B_TILE, data_dim] f32
                  we_ref, be_ref,                  # [d_in, 128] bf16, [1, 128] f32
                  w1_ref, b1_ref,                  # [128, 256] bf16,  [1, 256] f32
                  w2_ref, b2_ref,                  # [256, 256] bf16,  [1, 256] f32
                  w3_ref, b3_ref,                  # [256, 256] bf16,  [1, 256] f32
                  w4_ref, b4_ref,                  # [256, 256] bf16,  [1, 256] f32
                  wp_ref, bp_ref,                  # [256, 32]  bf16,  [1, 32]  f32
                  wo_ref, bo_ref,                  # [1, 32]    f32,   [1, 1]   f32
                  q_ref,                           # [B_TILE, 1] f32
                  *, d_in):
    # Fused embedding (no activation):
    #   e_obs + e_z == data[:, :d_in] @ concat(W_obs, W_z) + (b_obs + b_z)
    x = jnp.dot(data_ref[:, :d_in].astype(jnp.bfloat16), we_ref[...],
                preferred_element_type=jnp.float32) + be_ref[...]

    # 4 hidden layers (Linear + ReLU), statically unrolled; bf16 MXU, f32 accum.
    for w_ref, b_ref in ((w1_ref, b1_ref), (w2_ref, b2_ref),
                         (w3_ref, b3_ref), (w4_ref, b4_ref)):
        x = jnp.dot(x.astype(jnp.bfloat16), w_ref[...],
                    preferred_element_type=jnp.float32) + b_ref[...]
        x = jnp.maximum(x, 0.0)

    # post_pol: Linear(256 -> 32) + ReLU.
    x = jnp.dot(x.astype(jnp.bfloat16), wp_ref[...],
                preferred_element_type=jnp.float32) + bp_ref[...]
    x = jnp.maximum(x, 0.0)

    # out: Linear(32 -> 1) as a lane reduction (VPU/XLU) — skips a 1-wide MXU matmul.
    q_ref[...] = jnp.sum(x * wo_ref[...], axis=-1, keepdims=True) + bo_ref[...]


def prepare_params(params):
    """One-time weight prep: fuse the two embeddings, cast matmul weights to bf16."""
    bf16 = jnp.bfloat16
    w_embed = jnp.concatenate([params["w_obs"], params["w_z"]], axis=0).astype(bf16)
    b_embed = (params["b_obs"] + params["b_z"]).astype(jnp.float32)
    prepped = [w_embed, b_embed]
    for i in range(1, N_HIDDEN_LAYERS + 1):
        prepped += [params[f"w_l{i}"].astype(bf16), params[f"b_l{i}"]]
    prepped += [params["w_post"].astype(bf16), params["b_post"],
                params["w_out"].T.astype(jnp.float32),   # [1, 32] for the lane reduce
                params["b_out"]]
    return tuple(prepped)


def critic_forward(data, prepped, obs_dim, z_dim, b_tile=256):
    """Returns qvalue = Critic(data), shape [B, 1], f32."""
    B, data_dim = data.shape
    d_in = obs_dim + z_dim
    assert data_dim >= d_in

    bt = min(b_tile, _round_up(B, 8))       # row tile: multiple of 8 sublanes
    b_pad = _round_up(B, bt)
    if b_pad != B:
        data = jnp.pad(data, ((0, b_pad - B), (0, 0)))

    data_spec = pl.BlockSpec((bt, data_dim), lambda i: (i, 0))
    # Weights/biases: full-extent blocks with a constant index_map -> fetched
    # once, VMEM-resident across all batch tiles.
    weight_specs = [pl.BlockSpec(p.shape, lambda i: (0, 0)) for p in prepped]

    q = pl.pallas_call(
        functools.partial(critic_kernel, d_in=d_in),
        out_shape=jax.ShapeDtypeStruct((b_pad, 1), jnp.float32),
        grid=(b_pad // bt,),
        in_specs=[data_spec] + weight_specs,
        out_specs=pl.BlockSpec((bt, 1), lambda i: (i, 0)),
        compiler_params=pltpu.CompilerParams(
            dimension_semantics=("parallel",),        # megacore on v7x
            vmem_limit_bytes=32 * 1024 * 1024),
    )(data, *prepped)
    return q[:B]


def init_params(key, obs_dim, z_dim):
    """PyTorch nn.Linear-style init; weights stored pre-transposed [in, out]."""
    def linear(k, fan_in, fan_out):
        kw, kb = jax.random.split(k)
        bound = 1.0 / jnp.sqrt(jnp.float32(fan_in))
        w = jax.random.uniform(kw, (fan_in, fan_out), jnp.float32, -bound, bound)
        b = jax.random.uniform(kb, (1, fan_out), jnp.float32, -bound, bound)
        return w, b

    keys = jax.random.split(key, 4 + N_HIDDEN_LAYERS)
    params = {}
    params["w_obs"], params["b_obs"] = linear(keys[0], obs_dim, EMBED)
    params["w_z"], params["b_z"] = linear(keys[1], z_dim, EMBED)
    dims = [EMBED] + [HIDDEN] * N_HIDDEN_LAYERS
    for i in range(N_HIDDEN_LAYERS):
        params[f"w_l{i + 1}"], params[f"b_l{i + 1}"] = linear(keys[2 + i],
                                                              dims[i], dims[i + 1])
    params["w_post"], params["b_post"] = linear(keys[2 + N_HIDDEN_LAYERS], HIDDEN, POST)
    params["w_out"], params["b_out"] = linear(keys[3 + N_HIDDEN_LAYERS], POST, 1)
    return params


def reference_forward(data, params, obs_dim, z_dim):
    """Pure-JAX f32 reference matching the PyTorch Critic exactly."""
    e_obs = data[:, :obs_dim] @ params["w_obs"] + params["b_obs"]
    e_z = data[:, obs_dim:obs_dim + z_dim] @ params["w_z"] + params["b_z"]
    x = e_obs + e_z
    for i in range(1, N_HIDDEN_LAYERS + 1):
        x = jnp.maximum(x @ params[f"w_l{i}"] + params[f"b_l{i}"], 0.0)
    x = jnp.maximum(x @ params["w_post"] + params["b_post"], 0.0)
    return x @ params["w_out"] + params["b_out"]


if __name__ == "__main__":
    key = jax.random.PRNGKey(0)
    k_data, k_params = jax.random.split(key)

    batch = 2
    obs_dim, z_dim = 32, 12
    data_dim = obs_dim + z_dim + 4   # extra trailing features; forward slices them off

    data = jax.random.normal(k_data, (batch, data_dim), jnp.float32)
    params = init_params(k_params, obs_dim, z_dim)
    prepped = prepare_params(params)

    q = critic_forward(data, prepped, obs_dim, z_dim)
    jax.block_until_ready(q)

    q_ref = reference_forward(data, params, obs_dim, z_dim)
    assert q.shape == (batch, 1)
    # bf16 matmul operands (f32 accumulation) -> loosened tolerance vs f32 reference.
    assert jnp.allclose(q, q_ref, atol=3e-2, rtol=3e-2), (q, q_ref)

    print("KERNEL_OK")
</pallas_src>

<mosaic_0001>
module attributes {stable_mosaic.version = 11 : i64} {
  func.func @critic_kernel(%arg0: i32, %arg1: memref<8x48xf32, #tpu.memory_space<vmem>>, %arg2: memref<44x128xbf16, #tpu.memory_space<vmem>>, %arg3: memref<1x128xf32, #tpu.memory_space<vmem>>, %arg4: memref<128x256xbf16, #tpu.memory_space<vmem>>, %arg5: memref<1x256xf32, #tpu.memory_space<vmem>>, %arg6: memref<256x256xbf16, #tpu.memory_space<vmem>>, %arg7: memref<1x256xf32, #tpu.memory_space<vmem>>, %arg8: memref<256x256xbf16, #tpu.memory_space<vmem>>, %arg9: memref<1x256xf32, #tpu.memory_space<vmem>>, %arg10: memref<256x256xbf16, #tpu.memory_space<vmem>>, %arg11: memref<1x256xf32, #tpu.memory_space<vmem>>, %arg12: memref<256x32xbf16, #tpu.memory_space<vmem>>, %arg13: memref<1x32xf32, #tpu.memory_space<vmem>>, %arg14: memref<1x32xf32, #tpu.memory_space<vmem>>, %arg15: memref<1x1xf32, #tpu.memory_space<vmem>>, %arg16: memref<8x1xf32, #tpu.memory_space<vmem>>) attributes {dimension_semantics = [#tpu.dimension_semantics<parallel>], iteration_bounds = array<i64: 1>, scalar_prefetch = 0 : i64, scratch_operands = 0 : i64, tpu.core_type = #tpu.core_type<tc>, window_params = [{transform_indices = @transform_0, window_bounds = array<i64: 8, 48>}, {pipeline_mode = #tpu.pipeline_mode<synchronous>, transform_indices = @transform_1, window_bounds = array<i64: 44, 128>}, {pipeline_mode = #tpu.pipeline_mode<synchronous>, transform_indices = @transform_2, window_bounds = array<i64: 1, 128>}, {pipeline_mode = #tpu.pipeline_mode<synchronous>, transform_indices = @transform_3, window_bounds = array<i64: 128, 256>}, {pipeline_mode = #tpu.pipeline_mode<synchronous>, transform_indices = @transform_4, window_bounds = array<i64: 1, 256>}, {pipeline_mode = #tpu.pipeline_mode<synchronous>, transform_indices = @transform_5, window_bounds = array<i64: 256, 256>}, {pipeline_mode = #tpu.pipeline_mode<synchronous>, transform_indices = @transform_6, window_bounds = array<i64: 1, 256>}, {pipeline_mode = #tpu.pipeline_mode<synchronous>, transform_indices = @transform_7, window_bounds = array<i64: 256, 256>}, {pipeline_mode = #tpu.pipeline_mode<synchronous>, transform_indices = @transform_8, window_bounds = array<i64: 1, 256>}, {pipeline_mode = #tpu.pipeline_mode<synchronous>, transform_indices = @transform_9, window_bounds = array<i64: 256, 256>}, {pipeline_mode = #tpu.pipeline_mode<synchronous>, transform_indices = @transform_10, window_bounds = array<i64: 1, 256>}, {pipeline_mode = #tpu.pipeline_mode<synchronous>, transform_indices = @transform_11, window_bounds = array<i64: 256, 32>}, {pipeline_mode = #tpu.pipeline_mode<synchronous>, transform_indices = @transform_12, window_bounds = array<i64: 1, 32>}, {pipeline_mode = #tpu.pipeline_mode<synchronous>, transform_indices = @transform_13, window_bounds = array<i64: 1, 32>}, {pipeline_mode = #tpu.pipeline_mode<synchronous>, transform_indices = @transform_14, window_bounds = array<i64: 1, 1>}, {transform_indices = @transform_15, window_bounds = array<i64: 8, 1>}]} {
    %c0 = arith.constant 0 : index
    %c0_0 = arith.constant 0 : index
    %0 = vector.load %arg1[%c0, %c0_0] : memref<8x48xf32, #tpu.memory_space<vmem>>, vector<8x44xf32>
    %1 = arith.truncf %0 : vector<8x44xf32> to vector<8x44xbf16>
    %c0_1 = arith.constant 0 : index
    %c0_2 = arith.constant 0 : index
    %2 = vector.load %arg2[%c0_1, %c0_2] : memref<44x128xbf16, #tpu.memory_space<vmem>>, vector<44x128xbf16>
    %cst = arith.constant dense<0.000000e+00> : vector<8x128xf32>
    %3 = tpu.matmul %1, %2, %cst {dimension_numbers = #tpu.dot_dimension_numbers<[1], [0], [0], [1], [0, 0, 1, 1], [], []>} : vector<8x44xbf16>, vector<44x128xbf16>, vector<8x128xf32> -> vector<8x128xf32>
    %c0_3 = arith.constant 0 : index
    %c0_4 = arith.constant 0 : index
    %4 = vector.load %arg3[%c0_3, %c0_4] : memref<1x128xf32, #tpu.memory_space<vmem>>, vector<1x128xf32>
    %5 = vector.broadcast %4 : vector<1x128xf32> to vector<8x128xf32>
    %6 = arith.addf %3, %5 : vector<8x128xf32>
    %7 = arith.truncf %6 : vector<8x128xf32> to vector<8x128xbf16>
    %c0_5 = arith.constant 0 : index
    %c0_6 = arith.constant 0 : index
    %8 = vector.load %arg4[%c0_5, %c0_6] : memref<128x256xbf16, #tpu.memory_space<vmem>>, vector<128x256xbf16>
    %cst_7 = arith.constant dense<0.000000e+00> : vector<8x256xf32>
    %9 = tpu.matmul %7, %8, %cst_7 {dimension_numbers = #tpu.dot_dimension_numbers<[1], [0], [0], [1], [0, 0, 1, 1], [], []>} : vector<8x128xbf16>, vector<128x256xbf16>, vector<8x256xf32> -> vector<8x256xf32>
    %c0_8 = arith.constant 0 : index
    %c0_9 = arith.constant 0 : index
    %10 = vector.load %arg5[%c0_8, %c0_9] : memref<1x256xf32, #tpu.memory_space<vmem>>, vector<1x256xf32>
    %11 = vector.broadcast %10 : vector<1x256xf32> to vector<8x256xf32>
    %12 = arith.addf %9, %11 : vector<8x256xf32>
    %cst_10 = arith.constant 0.000000e+00 : f32
    %13 = vector.broadcast %cst_10 : f32 to vector<8x256xf32>
    %14 = arith.maximumf %12, %13 : vector<8x256xf32>
    %15 = arith.truncf %14 : vector<8x256xf32> to vector<8x256xbf16>
    %c0_11 = arith.constant 0 : index
    %c0_12 = arith.constant 0 : index
    %16 = vector.load %arg6[%c0_11, %c0_12] : memref<256x256xbf16, #tpu.memory_space<vmem>>, vector<256x256xbf16>
    %cst_13 = arith.constant dense<0.000000e+00> : vector<8x256xf32>
    %17 = tpu.matmul %15, %16, %cst_13 {dimension_numbers = #tpu.dot_dimension_numbers<[1], [0], [0], [1], [0, 0, 1, 1], [], []>} : vector<8x256xbf16>, vector<256x256xbf16>, vector<8x256xf32> -> vector<8x256xf32>
    %c0_14 = arith.constant 0 : index
    %c0_15 = arith.constant 0 : index
    %18 = vector.load %arg7[%c0_14, %c0_15] : memref<1x256xf32, #tpu.memory_space<vmem>>, vector<1x256xf32>
    %19 = vector.broadcast %18 : vector<1x256xf32> to vector<8x256xf32>
    %20 = arith.addf %17, %19 : vector<8x256xf32>
    %cst_16 = arith.constant 0.000000e+00 : f32
    %21 = vector.broadcast %cst_16 : f32 to vector<8x256xf32>
    %22 = arith.maximumf %20, %21 : vector<8x256xf32>
    %23 = arith.truncf %22 : vector<8x256xf32> to vector<8x256xbf16>
    %c0_17 = arith.constant 0 : index
    %c0_18 = arith.constant 0 : index
    %24 = vector.load %arg8[%c0_17, %c0_18] : memref<256x256xbf16, #tpu.memory_space<vmem>>, vector<256x256xbf16>
    %cst_19 = arith.constant dense<0.000000e+00> : vector<8x256xf32>
    %25 = tpu.matmul %23, %24, %cst_19 {dimension_numbers = #tpu.dot_dimension_numbers<[1], [0], [0], [1], [0, 0, 1, 1], [], []>} : vector<8x256xbf16>, vector<256x256xbf16>, vector<8x256xf32> -> vector<8x256xf32>
    %c0_20 = arith.constant 0 : index
    %c0_21 = arith.constant 0 : index
    %26 = vector.load %arg9[%c0_20, %c0_21] : memref<1x256xf32, #tpu.memory_space<vmem>>, vector<1x256xf32>
    %27 = vector.broadcast %26 : vector<1x256xf32> to vector<8x256xf32>
    %28 = arith.addf %25, %27 : vector<8x256xf32>
    %cst_22 = arith.constant 0.000000e+00 : f32
    %29 = vector.broadcast %cst_22 : f32 to vector<8x256xf32>
    %30 = arith.maximumf %28, %29 : vector<8x256xf32>
    %31 = arith.truncf %30 : vector<8x256xf32> to vector<8x256xbf16>
    %c0_23 = arith.constant 0 : index
    %c0_24 = arith.constant 0 : index
    %32 = vector.load %arg10[%c0_23, %c0_24] : memref<256x256xbf16, #tpu.memory_space<vmem>>, vector<256x256xbf16>
    %cst_25 = arith.constant dense<0.000000e+00> : vector<8x256xf32>
    %33 = tpu.matmul %31, %32, %cst_25 {dimension_numbers = #tpu.dot_dimension_numbers<[1], [0], [0], [1], [0, 0, 1, 1], [], []>} : vector<8x256xbf16>, vector<256x256xbf16>, vector<8x256xf32> -> vector<8x256xf32>
    %c0_26 = arith.constant 0 : index
    %c0_27 = arith.constant 0 : index
    %34 = vector.load %arg11[%c0_26, %c0_27] : memref<1x256xf32, #tpu.memory_space<vmem>>, vector<1x256xf32>
    %35 = vector.broadcast %34 : vector<1x256xf32> to vector<8x256xf32>
    %36 = arith.addf %33, %35 : vector<8x256xf32>
    %cst_28 = arith.constant 0.000000e+00 : f32
    %37 = vector.broadcast %cst_28 : f32 to vector<8x256xf32>
    %38 = arith.maximumf %36, %37 : vector<8x256xf32>
    %39 = arith.truncf %38 : vector<8x256xf32> to vector<8x256xbf16>
    %c0_29 = arith.constant 0 : index
    %c0_30 = arith.constant 0 : index
    %40 = vector.load %arg12[%c0_29, %c0_30] : memref<256x32xbf16, #tpu.memory_space<vmem>>, vector<256x32xbf16>
    %cst_31 = arith.constant dense<0.000000e+00> : vector<8x32xf32>
    %41 = tpu.matmul %39, %40, %cst_31 {dimension_numbers = #tpu.dot_dimension_numbers<[1], [0], [0], [1], [0, 0, 1, 1], [], []>} : vector<8x256xbf16>, vector<256x32xbf16>, vector<8x32xf32> -> vector<8x32xf32>
    %c0_32 = arith.constant 0 : index
    %c0_33 = arith.constant 0 : index
    %42 = vector.load %arg13[%c0_32, %c0_33] : memref<1x32xf32, #tpu.memory_space<vmem>>, vector<1x32xf32>
    %43 = vector.broadcast %42 : vector<1x32xf32> to vector<8x32xf32>
    %44 = arith.addf %41, %43 : vector<8x32xf32>
    %cst_34 = arith.constant 0.000000e+00 : f32
    %45 = vector.broadcast %cst_34 : f32 to vector<8x32xf32>
    %46 = arith.maximumf %44, %45 : vector<8x32xf32>
    %c0_35 = arith.constant 0 : index
    %c0_36 = arith.constant 0 : index
    %47 = vector.load %arg14[%c0_35, %c0_36] : memref<1x32xf32, #tpu.memory_space<vmem>>, vector<1x32xf32>
    %48 = vector.broadcast %47 : vector<1x32xf32> to vector<8x32xf32>
    %49 = arith.mulf %46, %48 : vector<8x32xf32>
    %cst_37 = arith.constant dense<0.000000e+00> : vector<8xf32>
    %50 = vector.multi_reduction <add>, %49, %cst_37 [1] : vector<8x32xf32> to vector<8xf32>
    %51 = vector.shape_cast %50 : vector<8xf32> to vector<8x1xf32>
    %c0_38 = arith.constant 0 : index
    %c0_39 = arith.constant 0 : index
    %52 = vector.load %arg15[%c0_38, %c0_39] : memref<1x1xf32, #tpu.memory_space<vmem>>, vector<1x1xf32>
    %53 = vector.broadcast %52 : vector<1x1xf32> to vector<8x1xf32>
    %54 = arith.addf %51, %53 : vector<8x1xf32>
    %c0_40 = arith.constant 0 : index
    %c0_41 = arith.constant 0 : index
    %55 = vector.load %arg16[%c0_40, %c0_41] : memref<8x1xf32, #tpu.memory_space<vmem>>, vector<8x1xf32>
    tpu.vector_store %arg16[%c0_40, %c0_41], %54 {strides = array<i32>} : memref<8x1xf32, #tpu.memory_space<vmem>>, vector<8x1xf32>,
    return
  }
  func.func @transform_0(%arg0: i32) -> (i32, i32) {
    %c0_i32 = arith.constant 0 : i32
    %c0_i32_0 = arith.constant 0 : i32
    return %arg0, %c0_i32 : i32, i32
  }
  func.func @transform_1(%arg0: i32) -> (i32, i32) {
    %c0_i32 = arith.constant 0 : i32
    %c0_i32_0 = arith.constant 0 : i32
    %c0_i32_1 = arith.constant 0 : i32
    return %c0_i32, %c0_i32_0 : i32, i32
  }
  func.func @transform_2(%arg0: i32) -> (i32, i32) {
    %c0_i32 = arith.constant 0 : i32
    %c0_i32_0 = arith.constant 0 : i32
    %c0_i32_1 = arith.constant 0 : i32
    return %c0_i32, %c0_i32_0 : i32, i32
  }
  func.func @transform_3(%arg0: i32) -> (i32, i32) {
    %c0_i32 = arith.constant 0 : i32
    %c0_i32_0 = arith.constant 0 : i32
    %c0_i32_1 = arith.constant 0 : i32
    return %c0_i32, %c0_i32_0 : i32, i32
  }
  func.func @transform_4(%arg0: i32) -> (i32, i32) {
    %c0_i32 = arith.constant 0 : i32
    %c0_i32_0 = arith.constant 0 : i32
    %c0_i32_1 = arith.constant 0 : i32
    return %c0_i32, %c0_i32_0 : i32, i32
  }
  func.func @transform_5(%arg0: i32) -> (i32, i32) {
    %c0_i32 = arith.constant 0 : i32
    %c0_i32_0 = arith.constant 0 : i32
    %c0_i32_1 = arith.constant 0 : i32
    return %c0_i32, %c0_i32_0 : i32, i32
  }
  func.func @transform_6(%arg0: i32) -> (i32, i32) {
    %c0_i32 = arith.constant 0 : i32
    %c0_i32_0 = arith.constant 0 : i32
    %c0_i32_1 = arith.constant 0 : i32
    return %c0_i32, %c0_i32_0 : i32, i32
  }
  func.func @transform_7(%arg0: i32) -> (i32, i32) {
    %c0_i32 = arith.constant 0 : i32
    %c0_i32_0 = arith.constant 0 : i32
    %c0_i32_1 = arith.constant 0 : i32
    return %c0_i32, %c0_i32_0 : i32, i32
  }
  func.func @transform_8(%arg0: i32) -> (i32, i32) {
    %c0_i32 = arith.constant 0 : i32
    %c0_i32_0 = arith.constant 0 : i32
    %c0_i32_1 = arith.constant 0 : i32
    return %c0_i32, %c0_i32_0 : i32, i32
  }
  func.func @transform_9(%arg0: i32) -> (i32, i32) {
    %c0_i32 = arith.constant 0 : i32
    %c0_i32_0 = arith.constant 0 : i32
    %c0_i32_1 = arith.constant 0 : i32
    return %c0_i32, %c0_i32_0 : i32, i32
  }
  func.func @transform_10(%arg0: i32) -> (i32, i32) {
    %c0_i32 = arith.constant 0 : i32
    %c0_i32_0 = arith.constant 0 : i32
    %c0_i32_1 = arith.constant 0 : i32
    return %c0_i32, %c0_i32_0 : i32, i32
  }
  func.func @transform_11(%arg0: i32) -> (i32, i32) {
    %c0_i32 = arith.constant 0 : i32
    %c0_i32_0 = arith.constant 0 : i32
    %c0_i32_1 = arith.constant 0 : i32
    return %c0_i32, %c0_i32_0 : i32, i32
  }
  func.func @transform_12(%arg0: i32) -> (i32, i32) {
    %c0_i32 = arith.constant 0 : i32
    %c0_i32_0 = arith.constant 0 : i32
    %c0_i32_1 = arith.constant 0 : i32
    return %c0_i32, %c0_i32_0 : i32, i32
  }
  func.func @transform_13(%arg0: i32) -> (i32, i32) {
    %c0_i32 = arith.constant 0 : i32
    %c0_i32_0 = arith.constant 0 : i32
    %c0_i32_1 = arith.constant 0 : i32
    return %c0_i32, %c0_i32_0 : i32, i32
  }
  func.func @transform_14(%arg0: i32) -> (i32, i32) {
    %c0_i32 = arith.constant 0 : i32
    %c0_i32_0 = arith.constant 0 : i32
    %c0_i32_1 = arith.constant 0 : i32
    return %c0_i32, %c0_i32_0 : i32, i32
  }
  func.func @transform_15(%arg0: i32) -> (i32, i32) {
    %c0_i32 = arith.constant 0 : i32
    %c0_i32_0 = arith.constant 0 : i32
    return %arg0, %c0_i32 : i32, i32
  }
}

</mosaic_0001>

<llo_original>
// kernel: tpu_custom_call.1
$region0: #{tpu_custom_call.1}
  #allocation0 [shape = 'u32[]', space=smem, size = 0x4, offset = 0x4, fixed_abs, tag = 'smem constant byte address 0x4 - core index']
  #allocation1 [shape = 'u32[144,128]{1,0:T(1,128)}', space=vmem, size = 0x12000, scoped, tag = 'internal scratch']
  #allocation2 [shape = 'f32[1,1]{1,0:T(1,128)S(1)}', space=vmem, size = 0x200, scoped, tag = 'scoped memory for tpu_custom_call.1']
  %s0 = inlined_call_operand.vmem [shape: f32[8,48], index: 0, kind: input, shape index: {}]
  %s1 = inlined_call_operand.vmem [shape: bf16[44,128], index: 1, kind: input, shape index: {}]
  %s2 = inlined_call_operand.vmem [shape: f32[1,128], index: 2, kind: input, shape index: {}]
  %s3 = inlined_call_operand.vmem [shape: bf16[128,256], index: 3, kind: input, shape index: {}]
  %s4 = inlined_call_operand.vmem [shape: f32[1,256], index: 4, kind: input, shape index: {}]
  %s5 = inlined_call_operand.hbm [shape: bf16[256,256], index: 5, kind: input, shape index: {}]
  %s6 = inlined_call_operand.vmem [shape: f32[1,256], index: 6, kind: input, shape index: {}]
  %s7 = inlined_call_operand.hbm [shape: bf16[256,256], index: 7, kind: input, shape index: {}]
  %s8 = inlined_call_operand.vmem [shape: f32[1,256], index: 8, kind: input, shape index: {}]
  %s9 = inlined_call_operand.hbm [shape: bf16[256,256], index: 9, kind: input, shape index: {}]
  %s10 = inlined_call_operand.vmem [shape: f32[1,256], index: 10, kind: input, shape index: {}]
  %s11 = inlined_call_operand.vmem [shape: bf16[256,32], index: 11, kind: input, shape index: {}]
  %s12 = inlined_call_operand.vmem [shape: f32[1,32], index: 12, kind: input, shape index: {}]
  %s13 = inlined_call_operand.vmem [shape: f32[1,32], index: 13, kind: input, shape index: {}]
  %s14 = inlined_call_operand.<no memory space> [shape: f32[1,1], index: 14, kind: input, shape index: {}]
  %s15 = inlined_call_operand.vmem [shape: f32[8,1], index: 15, kind: output, shape index: {}]
  %s16 = sld [smem:[#allocation0]]
  $region82: #{tpu_custom_call.1} parent=0
    _
  %s18 = ssub.s32 1, %s16
  %s19 = scalar_select 0, %s18, %s16
  %v20 = vstv %s14
  %21 = vst [vmem:[#allocation2] sm:$0x1] %v20
  $region1: #{tpu_custom_call.1} parent=0
    #allocation3 [shape = 'u8[131072]{0}', space=vmem, size = 0x20000, scoped, tag = 'input window, operand 5, single buffered']
    #allocation4 [shape = 's32[1]{0}', space=sflag, size = 0x4, scoped, tag = 'scoped memory for tpu_custom_call.1']
    #allocation5 [shape = 'u8[131072]{0}', space=vmem, size = 0x20000, scoped, tag = 'input window, operand 7, single buffered']
    #allocation6 [shape = 's32[1]{0}', space=sflag, size = 0x4, scoped, tag = 'scoped memory for tpu_custom_call.1']
    #allocation7 [shape = 'u8[131072]{0}', space=vmem, size = 0x20000, scoped, tag = 'input window, operand 9, single buffered']
    %22 = vsyncpa [#allocation4], 0
    %23 = vsyncpa [#allocation6], 0
    // Predicated region
    $region2: #{tpu_custom_call.1} parent=1 // pred_check
      _
    $region3: #{tpu_custom_call.1} parent=1 // pred_check_branch
      %25 = sbr.rel (0) target = $region5
    $region4: #{tpu_custom_call.1} parent=1 // pred_region
      _
    $region5: #{tpu_custom_call.1} parent=1 // pred_fallthru
      _
    // Predicated region
    $region6: #{tpu_custom_call.1} parent=1 // pred_check
      _
    $region7: #{tpu_custom_call.1} parent=1 // pred_check_branch
      %27 = sbr.rel (0) target = $region9
    $region8: #{tpu_custom_call.1} parent=1 // pred_region
      _
    $region9: #{tpu_custom_call.1} parent=1 // pred_fallthru
      _
    // Predicated region
    $region10: #{tpu_custom_call.1} parent=1 // pred_check
      _
    $region11: #{tpu_custom_call.1} parent=1 // pred_check_branch
      %29 = sbr.rel (0) target = $region13
    $region12: #{tpu_custom_call.1} parent=1 // pred_region
      _
    $region13: #{tpu_custom_call.1} parent=1 // pred_fallthru
      _
    // Predicated region
    $region14: #{tpu_custom_call.1} parent=1 // pred_check
      _
    $region15: #{tpu_custom_call.1} parent=1 // pred_check_branch
      %31 = sbr.rel (0) target = $region17
    $region16: #{tpu_custom_call.1} parent=1 // pred_region
      _
    $region17: #{tpu_custom_call.1} parent=1 // pred_fallthru
      _
    // Predicated region
    $region18: #{tpu_custom_call.1} parent=1 // pred_check
      _
    $region19: #{tpu_custom_call.1} parent=1 // pred_check_branch
      %33 = sbr.rel (0) target = $region21
    $region20: #{tpu_custom_call.1} parent=1 // pred_region
      _
    $region21: #{tpu_custom_call.1} parent=1 // pred_fallthru
      _
    // Predicated region
    $region22: #{tpu_custom_call.1} parent=1 // pred_check
      _
    $region23: #{tpu_custom_call.1} parent=1 // pred_check_branch
      %35 = sbr.rel (0) target = $region25
    $region24: #{tpu_custom_call.1} parent=1 // pred_region
      %s37 = ssub.s32 4096, 4096
      %38 = vsyncadd [#allocation4], %s37
      %s39 = sshll.u32 [#allocation3], 4
      %s40 = int_to_ptr.vmem [resolvable:$true] %s39
      %45 = dma.hbm_to_vmem [thread:$0]  %s5, 4096, %s40, [#allocation4], 128, 128, 8
    $region25: #{tpu_custom_call.1} parent=1 // pred_fallthru
      _
    // Predicated region
    $region26: #{tpu_custom_call.1} parent=1 // pred_check
      _
    $region27: #{tpu_custom_call.1} parent=1 // pred_check_branch
      %47 = sbr.rel (0) target = $region29
    $region28: #{tpu_custom_call.1} parent=1 // pred_region
      _
    $region29: #{tpu_custom_call.1} parent=1 // pred_fallthru
      _
    // Predicated region
    $region30: #{tpu_custom_call.1} parent=1 // pred_check
      _
    $region31: #{tpu_custom_call.1} parent=1 // pred_check_branch
      %49 = sbr.rel (0) target = $region33
    $region32: #{tpu_custom_call.1} parent=1 // pred_region
      %s51 = ssub.s32 4096, 4096
      %52 = vsyncadd [#allocation6], %s51
      %s53 = sshll.u32 [#allocation5], 4
      %s54 = int_to_ptr.vmem [resolvable:$true] %s53
      %59 = dma.hbm_to_vmem [thread:$0]  %s7, 4096, %s54, [#allocation6], 128, 128, 8
    $region33: #{tpu_custom_call.1} parent=1 // pred_fallthru
      _
    // Predicated region
    $region34: #{tpu_custom_call.1} parent=1 // pred_check
      _
    $region35: #{tpu_custom_call.1} parent=1 // pred_check_branch
      %61 = sbr.rel (0) target = $region37
    $region36: #{tpu_custom_call.1} parent=1 // pred_region
      _
    $region37: #{tpu_custom_call.1} parent=1 // pred_fallthru
      _
    // Predicated region
    $region38: #{tpu_custom_call.1} parent=1 // pred_check
      _
    $region39: #{tpu_custom_call.1} parent=1 // pred_check_branch
      %63 = sbr.rel (0) target = $region41
    $region40: #{tpu_custom_call.1} parent=1 // pred_region
      %s65 = ssub.s32 4096, 4096
      %66 = vsyncadd [#allocation6], %s65
      %s67 = sshll.u32 [#allocation7], 4
      %s68 = int_to_ptr.vmem [resolvable:$true] %s67
      %73 = dma.hbm_to_vmem [thread:$0]  %s9, 4096, %s68, [#allocation6], 128, 128, 8
    $region41: #{tpu_custom_call.1} parent=1 // pred_fallthru
      _
    // Predicated region
    $region42: #{tpu_custom_call.1} parent=1 // pred_check
      _
    $region43: #{tpu_custom_call.1} parent=1 // pred_check_branch
      %75 = sbr.rel (0) target = $region45
    $region44: #{tpu_custom_call.1} parent=1 // pred_region
      _
    $region45: #{tpu_custom_call.1} parent=1 // pred_fallthru
      _
    // Predicated region
    $region46: #{tpu_custom_call.1} parent=1 // pred_check
      _
    $region47: #{tpu_custom_call.1} parent=1 // pred_check_branch
      %77 = sbr.rel (0) target = $region49
    $region48: #{tpu_custom_call.1} parent=1 // pred_region
      _
    $region49: #{tpu_custom_call.1} parent=1 // pred_fallthru
      _
    // Predicated region
    $region50: #{tpu_custom_call.1} parent=1 // pred_check
      _
    $region51: #{tpu_custom_call.1} parent=1 // pred_check_branch
      %79 = sbr.rel (0) target = $region53
    $region52: #{tpu_custom_call.1} parent=1 // pred_region
      _
    $region53: #{tpu_custom_call.1} parent=1 // pred_fallthru
      _
    // Predicated region
    $region54: #{tpu_custom_call.1} parent=1 // pred_check
      _
    $region55: #{tpu_custom_call.1} parent=1 // pred_check_branch
      %81 = sbr.rel (0) target = $region57
    $region56: #{tpu_custom_call.1} parent=1 // pred_region
      _
    $region57: #{tpu_custom_call.1} parent=1 // pred_fallthru
      _
    // Predicated region
    $region58: #{tpu_custom_call.1} parent=1 // pred_check
      _
    $region59: #{tpu_custom_call.1} parent=1 // pred_check_branch
      %83 = sbr.rel (0) target = $region61
    $region60: #{tpu_custom_call.1} parent=1 // pred_region
      _
    $region61: #{tpu_custom_call.1} parent=1 // pred_fallthru
      _
    // Predicated region
    $region62: #{tpu_custom_call.1} parent=1 // pred_check
      _
    $region63: #{tpu_custom_call.1} parent=1 // pred_check_branch
      %85 = sbr.rel (0) target = $region65
    $region64: #{tpu_custom_call.1} parent=1 // pred_region
      %86 = dma.done [#allocation4], 4096
    $region65: #{tpu_custom_call.1} parent=1 // pred_fallthru
      _
    // Predicated region
    $region66: #{tpu_custom_call.1} parent=1 // pred_check
      _
    $region67: #{tpu_custom_call.1} parent=1 // pred_check_branch
      %88 = sbr.rel (0) target = $region69
    $region68: #{tpu_custom_call.1} parent=1 // pred_region
      %89 = dma.done [#allocation6], 4096
    $region69: #{tpu_custom_call.1} parent=1 // pred_fallthru
      _
    // Predicated region
    $region70: #{tpu_custom_call.1} parent=1 // pred_check
      _
    $region71: #{tpu_custom_call.1} parent=1 // pred_check_branch
      %91 = sbr.rel (0) target = $region73
    $region72: #{tpu_custom_call.1} parent=1 // pred_region
      %92 = dma.done [#allocation6], 4096
    $region73: #{tpu_custom_call.1} parent=1 // pred_fallthru
      _
    %v94 = vld [vmem:[%s0] sm:$0xff]
    %v95 = vpack.c.bf16 %v94, %v94
    %v96 = vld [vmem:[%s1] sm:$0xf]
    %v97 = vld [vmem:[%s1 + $0x4] sm:$0xf]
    %v98 = vld [vmem:[%s1 + $0x8] sm:$0xf]
    %v99 = vld [vmem:[%s1 + $0xc] sm:$0xf]
    %v100 = vld [vmem:[%s1 + $0x10] sm:$0xf]
    %v101 = vld [vmem:[%s1 + $0x14] sm:$0x3]
    %v102 = vld [vmem:[%s2] sm:$0x1]
    %v104 = vlaneseq
    %v105 = vshrl.u32 %v104, 7
    %v106 = vsub.s32 0, %v105
    %v107 = vrot.slane %v102, %v106
    %v115 = vunpack.c.l.b16 %v96
    %v116 = vunpack.c.l.b16 %v97
    %v117 = vunpack.c.l.b16 %v98
    %v118 = vunpack.c.l.b16 %v99
    %v119 = vunpack.c.l.b16 %v100
    %v120 = vunpack.c.l.b16 %v101
    %v121 = vpack.c.b16 %v116, %v115
    %v122 = vpack.c.b16 %v118, %v117
    %v123 = vpack.c.b16 %v120, %v119
    %vm126 = vcmask 359424
    %v128 = vsel %vm126, %v95, 0
    %vm130 = vcmask 1045504
    %v132 = vsel %vm130, %v123, 0
    %134 = vmatprep.subr.bf16.mxu0 0
    %135 = vmatpush1.bf16.msra.mxu0 %v121
    %136 = vmatprep.subr.bf16.mxu0 0
    %137 = vmatpush1.bf16.msra.mxu0 %v122
    %138 = vmatprep.subr.bf16.mxu0 0
    %139 = vmatpush1.bf16.msra.mxu0 %v132
    %140 = vmatprep.subr.bf16.mxu0 0
    %141 = vmatpush1.bf16.msra.mxu0 0
    %142 = vmatprep.subr.bf16.mxu0 0
    %143 = vmatpush1.bf16.msra.mxu0 0
    %144 = vmatprep.subr.bf16.mxu0 0
    %145 = vmatpush1.bf16.msra.mxu0 0
    %146 = vmatprep.subr.bf16.mxu0 0
    %147 = vmatpush1.bf16.msra.mxu0 0
    %148 = vmatprep.subr.bf16.mxu0 0
    %149 = vmatpush1.bf16.msra.mxu0 0
    %150 = vmatprep.subr.bf16.mxu0 0
    %151 = vmatpush1.bf16.msra.mxu0 0
    %152 = vmatprep.subr.bf16.mxu0 0
    %153 = vmatpush1.bf16.msra.mxu0 0
    %154 = vmatprep.subr.bf16.mxu0 0
    %155 = vmatpush1.bf16.msra.mxu0 0
    %156 = vmatprep.subr.bf16.mxu0 0
    %157 = vmatpush1.bf16.msra.mxu0 0
    %158 = vmatprep.subr.bf16.mxu0 0
    %159 = vmatpush1.bf16.msra.mxu0 0
    %160 = vmatprep.subr.bf16.mxu0 0
    %161 = vmatpush1.bf16.msra.mxu0 0
    %162 = vmatprep.subr.bf16.mxu0 0
    %163 = vmatpush1.bf16.msra.mxu0 0
    %164 = vmatprep.subr.bf16.mxu0 0
    %165 = vmatpush1.bf16.msra.mxu0 0
    %166 = vmatprep.mubr.bf16.mxu0 0
    %167 = vmatmul.mubr.bf16.gmra.mrb[0].mxu0 %v128
    %v168 = vpop.f32.mrb[0].mxu0
    %v169 = vadd.f32 %v107, %v168
    %v170 = vpop.f32.mrb[0].mxu0
    %v171 = vpop.f32.mrb[0].mxu0
    %v172 = vpop.f32.mrb[0].mxu0
    %173 = vdwg.mxu0
    %v174 = vpack.c.bf16 %v169, %v169
    %v175 = vld [vmem:[%s3] sm:$0xff]
    %v176 = vld [vmem:[%s3 + $0x8] sm:$0xff]
    %v177 = vld [vmem:[%s3 + $0x10] sm:$0xff]
    %v178 = vld [vmem:[%s3 + $0x18] sm:$0xff]
    %v179 = vld [vmem:[%s3 + $0x20] sm:$0xff]
    %v180 = vld [vmem:[%s3 + $0x28] sm:$0xff]
    %v181 = vld [vmem:[%s3 + $0x30] sm:$0xff]
    %v182 = vld [vmem:[%s3 + $0x38] sm:$0xff]
    %v183 = vld [vmem:[%s3 + $0x40] sm:$0xff]
    %v184 = vld [vmem:[%s3 + $0x48] sm:$0xff]
    %v185 = vld [vmem:[%s3 + $0x50] sm:$0xff]
    %v186 = vld [vmem:[%s3 + $0x58] sm:$0xff]
    %v187 = vld [vmem:[%s3 + $0x60] sm:$0xff]
    %v188 = vld [vmem:[%s3 + $0x68] sm:$0xff]
    %v189 = vld [vmem:[%s3 + $0x70] sm:$0xff]
    %v190 = vld [vmem:[%s3 + $0x78] sm:$0xff]
    %v191 = vld [vmem:[%s4] sm:$0x3]
    %v193 = vlaneseq
    %v194 = vshrl.u32 %v193, 7
    %v195 = vsub.s32 0, %v194
    %v196 = vrot.slane %v191, %v195
    %v197 = vlaneseq
    %v198 = vshrl.u32 %v197, 7
    %v199 = vsub.s32 1, %v198
    %v200 = vrot.slane %v191, %v199
    %v219 = vunpack.c.l.b16 %v175
    %v220 = vunpack.c.h.b16 %v175
    %v221 = vunpack.c.l.b16 %v176
    %v222 = vunpack.c.h.b16 %v176
    %v223 = vunpack.c.l.b16 %v177
    %v224 = vunpack.c.h.b16 %v177
    %v225 = vunpack.c.l.b16 %v178
    %v226 = vunpack.c.h.b16 %v178
    %v227 = vunpack.c.l.b16 %v179
    %v228 = vunpack.c.h.b16 %v179
    %v229 = vunpack.c.l.b16 %v180
    %v230 = vunpack.c.h.b16 %v180
    %v231 = vunpack.c.l.b16 %v181
    %v232 = vunpack.c.h.b16 %v181
    %v233 = vunpack.c.l.b16 %v182
    %v234 = vunpack.c.h.b16 %v182
    %v235 = vunpack.c.l.b16 %v183
    %v236 = vunpack.c.h.b16 %v183
    %v237 = vunpack.c.l.b16 %v184
    %v238 = vunpack.c.h.b16 %v184
    %v239 = vunpack.c.l.b16 %v185
    %v240 = vunpack.c.h.b16 %v185
    %v241 = vunpack.c.l.b16 %v186
    %v242 = vunpack.c.h.b16 %v186
    %v243 = vunpack.c.l.b16 %v187
    %v244 = vunpack.c.h.b16 %v187
    %v245 = vunpack.c.l.b16 %v188
    %v246 = vunpack.c.h.b16 %v188
    %v247 = vunpack.c.l.b16 %v189
    %v248 = vunpack.c.h.b16 %v189
    %v249 = vunpack.c.l.b16 %v190
    %v250 = vunpack.c.h.b16 %v190
    %v251 = vpack.c.b16 %v221, %v219
    %v252 = vpack.c.b16 %v222, %v220
    %v253 = vpack.c.b16 %v225, %v223
    %v254 = vpack.c.b16 %v226, %v224
    %v255 = vpack.c.b16 %v229, %v227
    %v256 = vpack.c.b16 %v230, %v228
    %v257 = vpack.c.b16 %v233, %v231
    %v258 = vpack.c.b16 %v234, %v232
    %v259 = vpack.c.b16 %v237, %v235
    %v260 = vpack.c.b16 %v238, %v236
    %v261 = vpack.c.b16 %v241, %v239
    %v262 = vpack.c.b16 %v242, %v240
    %v263 = vpack.c.b16 %v245, %v243
    %v264 = vpack.c.b16 %v246, %v244
    %v265 = vpack.c.b16 %v249, %v247
    %v266 = vpack.c.b16 %v250, %v248
    %283 = vmatprep.subr.bf16.mxu0 %v252
    %284 = vmatpush1.bf16.msra.mxu0 %v251
    %285 = vmatprep.subr.bf16.mxu0 %v254
    %286 = vmatpush1.bf16.msra.mxu0 %v253
    %287 = vmatprep.subr.bf16.mxu0 %v256
    %288 = vmatpush1.bf16.msra.mxu0 %v255
    %289 = vmatprep.subr.bf16.mxu0 %v258
    %290 = vmatpush1.bf16.msra.mxu0 %v257
    %291 = vmatprep.subr.bf16.mxu0 %v260
    %292 = vmatpush1.bf16.msra.mxu0 %v259
    %293 = vmatprep.subr.bf16.mxu0 %v262
    %294 = vmatpush1.bf16.msra.mxu0 %v261
    %295 = vmatprep.subr.bf16.mxu0 %v264
    %296 = vmatpush1.bf16.msra.mxu0 %v263
    %297 = vmatprep.subr.bf16.mxu0 %v266
    %298 = vmatpush1.bf16.msra.mxu0 %v265
    %299 = vmatprep.subr.bf16.mxu0 0
    %300 = vmatpush1.bf16.msra.mxu0 0
    %301 = vmatprep.subr.bf16.mxu0 0
    %302 = vmatpush1.bf16.msra.mxu0 0
    %303 = vmatprep.subr.bf16.mxu0 0
    %304 = vmatpush1.bf16.msra.mxu0 0
    %305 = vmatprep.subr.bf16.mxu0 0
    %306 = vmatpush1.bf16.msra.mxu0 0
    %307 = vmatprep.subr.bf16.mxu0 0
    %308 = vmatpush1.bf16.msra.mxu0 0
    %309 = vmatprep.subr.bf16.mxu0 0
    %310 = vmatpush1.bf16.msra.mxu0 0
    %311 = vmatprep.subr.bf16.mxu0 0
    %312 = vmatpush1.bf16.msra.mxu0 0
    %313 = vmatprep.subr.bf16.mxu0 0
    %314 = vmatpush1.bf16.msra.mxu0 0
    %315 = vmatprep.mubr.bf16.mxu0 0
    %316 = vmatmul.mubr.bf16.gmra.mrb[0].mxu0 %v174
    %v317 = vpop.f32.mrb[0].mxu0
    %v318 = vadd.f32 %v196, %v317
    %v319 = vpop.f32.mrb[0].mxu0
    %v320 = vadd.f32 %v200, %v319
    %v321 = vpop.f32.mrb[0].mxu0
    %v322 = vpop.f32.mrb[0].mxu0
    %323 = vdwg.mxu0
    %v324 = vmax.f32 %v318, 0.0
    %v325 = vmax.f32 %v320, 0.0
    %v326 = vpack.c.bf16 %v324, %v324
    %v327 = vpack.c.bf16 %v325, %v325
    %v328 = vld [vmem:[#allocation3] sm:$0xff]
    %v329 = vld [vmem:[#allocation3 + $0x8] sm:$0xff]
    %v330 = vld [vmem:[#allocation3 + $0x10] sm:$0xff]
    %v331 = vld [vmem:[#allocation3 + $0x18] sm:$0xff]
    %v332 = vld [vmem:[#allocation3 + $0x20] sm:$0xff]
    %v333 = vld [vmem:[#allocation3 + $0x28] sm:$0xff]
    %v334 = vld [vmem:[#allocation3 + $0x30] sm:$0xff]
    %v335 = vld [vmem:[#allocation3 + $0x38] sm:$0xff]
    %v336 = vld [vmem:[#allocation3 + $0x40] sm:$0xff]
    %v337 = vld [vmem:[#allocation3 + $0x48] sm:$0xff]
    %v338 = vld [vmem:[#allocation3 + $0x50] sm:$0xff]
    %v339 = vld [vmem:[#allocation3 + $0x58] sm:$0xff]
    %v340 = vld [vmem:[#allocation3 + $0x60] sm:$0xff]
    %v341 = vld [vmem:[#allocation3 + $0x68] sm:$0xff]
    %v342 = vld [vmem:[#allocation3 + $0x70] sm:$0xff]
    %v343 = vld [vmem:[#allocation3 + $0x78] sm:$0xff]
    %v344 = vld [vmem:[#allocation3 + $0x80] sm:$0xff]
    %v345 = vld [vmem:[#allocation3 + $0x88] sm:$0xff]
    %v346 = vld [vmem:[#allocation3 + $0x90] sm:$0xff]
    %v347 = vld [vmem:[#allocation3 + $0x98] sm:$0xff]
    %v348 = vld [vmem:[#allocation3 + $0xa0] sm:$0xff]
    %v349 = vld [vmem:[#allocation3 + $0xa8] sm:$0xff]
    %v350 = vld [vmem:[#allocation3 + $0xb0] sm:$0xff]
    %v351 = vld [vmem:[#allocation3 + $0xb8] sm:$0xff]
    %v352 = vld [vmem:[#allocation3 + $0xc0] sm:$0xff]
    %v353 = vld [vmem:[#allocation3 + $0xc8] sm:$0xff]
    %v354 = vld [vmem:[#allocation3 + $0xd0] sm:$0xff]
    %v355 = vld [vmem:[#allocation3 + $0xd8] sm:$0xff]
    %v356 = vld [vmem:[#allocation3 + $0xe0] sm:$0xff]
    %v357 = vld [vmem:[#allocation3 + $0xe8] sm:$0xff]
    %v358 = vld [vmem:[#allocation3 + $0xf0] sm:$0xff]
    %v359 = vld [vmem:[#allocation3 + $0xf8] sm:$0xff]
    %v360 = vld [vmem:[%s6] sm:$0x3]
    %v362 = vlaneseq
    %v363 = vshrl.u32 %v362, 7
    %v364 = vsub.s32 0, %v363
    %v365 = vrot.slane %v360, %v364
    %v366 = vlaneseq
    %v367 = vshrl.u32 %v366, 7
    %v368 = vsub.s32 1, %v367
    %v369 = vrot.slane %v360, %v368
    %v404 = vunpack.c.l.b16 %v328
    %v405 = vunpack.c.h.b16 %v328
    %v406 = vunpack.c.l.b16 %v329
    %v407 = vunpack.c.h.b16 %v329
    %v408 = vunpack.c.l.b16 %v330
    %v409 = vunpack.c.h.b16 %v330
    %v410 = vunpack.c.l.b16 %v331
    %v411 = vunpack.c.h.b16 %v331
    %v412 = vunpack.c.l.b16 %v332
    %v413 = vunpack.c.h.b16 %v332
    %v414 = vunpack.c.l.b16 %v333
    %v415 = vunpack.c.h.b16 %v333
    %v416 = vunpack.c.l.b16 %v334
    %v417 = vunpack.c.h.b16 %v334
    %v418 = vunpack.c.l.b16 %v335
    %v419 = vunpack.c.h.b16 %v335
    %v420 = vunpack.c.l.b16 %v336
    %v421 = vunpack.c.h.b16 %v336
    %v422 = vunpack.c.l.b16 %v337
    %v423 = vunpack.c.h.b16 %v337
    %v424 = vunpack.c.l.b16 %v338
    %v425 = vunpack.c.h.b16 %v338
    %v426 = vunpack.c.l.b16 %v339
    %v427 = vunpack.c.h.b16 %v339
    %v428 = vunpack.c.l.b16 %v340
    %v429 = vunpack.c.h.b16 %v340
    %v430 = vunpack.c.l.b16 %v341
    %v431 = vunpack.c.h.b16 %v341
    %v432 = vunpack.c.l.b16 %v342
    %v433 = vunpack.c.h.b16 %v342
    %v434 = vunpack.c.l.b16 %v343
    %v435 = vunpack.c.h.b16 %v343
    %v436 = vunpack.c.l.b16 %v344
    %v437 = vunpack.c.h.b16 %v344
    %v438 = vunpack.c.l.b16 %v345
    %v439 = vunpack.c.h.b16 %v345
    %v440 = vunpack.c.l.b16 %v346
    %v441 = vunpack.c.h.b16 %v346
    %v442 = vunpack.c.l.b16 %v347
    %v443 = vunpack.c.h.b16 %v347
    %v444 = vunpack.c.l.b16 %v348
    %v445 = vunpack.c.h.b16 %v348
    %v446 = vunpack.c.l.b16 %v349
    %v447 = vunpack.c.h.b16 %v349
    %v448 = vunpack.c.l.b16 %v350
    %v449 = vunpack.c.h.b16 %v350
    %v450 = vunpack.c.l.b16 %v351
    %v451 = vunpack.c.h.b16 %v351
    %v452 = vunpack.c.l.b16 %v352
    %v453 = vunpack.c.h.b16 %v352
    %v454 = vunpack.c.l.b16 %v353
    %v455 = vunpack.c.h.b16 %v353
    %v456 = vunpack.c.l.b16 %v354
    %v457 = vunpack.c.h.b16 %v354
    %v458 = vunpack.c.l.b16 %v355
    %v459 = vunpack.c.h.b16 %v355
    %v460 = vunpack.c.l.b16 %v356
    %v461 = vunpack.c.h.b16 %v356
    %v462 = vunpack.c.l.b16 %v357
    %v463 = vunpack.c.h.b16 %v357
    %v464 = vunpack.c.l.b16 %v358
    %v465 = vunpack.c.h.b16 %v358
    %v466 = vunpack.c.l.b16 %v359
    %v467 = vunpack.c.h.b16 %v359
    %v468 = vpack.c.b16 %v406, %v404
    %v469 = vpack.c.b16 %v407, %v405
    %v470 = vpack.c.b16 %v410, %v408
    %v471 = vpack.c.b16 %v411, %v409
    %v472 = vpack.c.b16 %v414, %v412
    %v473 = vpack.c.b16 %v415, %v413
    %v474 = vpack.c.b16 %v418, %v416
    %v475 = vpack.c.b16 %v419, %v417
    %v476 = vpack.c.b16 %v422, %v420
    %v477 = vpack.c.b16 %v423, %v421
    %v478 = vpack.c.b16 %v426, %v424
    %v479 = vpack.c.b16 %v427, %v425
    %v480 = vpack.c.b16 %v430, %v428
    %v481 = vpack.c.b16 %v431, %v429
    %v482 = vpack.c.b16 %v434, %v432
    %v483 = vpack.c.b16 %v435, %v433
    %v484 = vpack.c.b16 %v438, %v436
    %v485 = vpack.c.b16 %v439, %v437
    %v486 = vpack.c.b16 %v442, %v440
    %v487 = vpack.c.b16 %v443, %v441
    %v488 = vpack.c.b16 %v446, %v444
    %v489 = vpack.c.b16 %v447, %v445
    %v490 = vpack.c.b16 %v450, %v448
    %v491 = vpack.c.b16 %v451, %v449
    %v492 = vpack.c.b16 %v454, %v452
    %v493 = vpack.c.b16 %v455, %v453
    %v494 = vpack.c.b16 %v458, %v456
    %v495 = vpack.c.b16 %v459, %v457
    %v496 = vpack.c.b16 %v462, %v460
    %v497 = vpack.c.b16 %v463, %v461
    %v498 = vpack.c.b16 %v466, %v464
    %v499 = vpack.c.b16 %v467, %v465
    %532 = vmatprep.subr.bf16.mxu0 %v469
    %533 = vmatpush1.bf16.msra.mxu0 %v468
    %534 = vmatprep.subr.bf16.mxu0 %v471
    %535 = vmatpush1.bf16.msra.mxu0 %v470
    %536 = vmatprep.subr.bf16.mxu0 %v473
    %537 = vmatpush1.bf16.msra.mxu0 %v472
    %538 = vmatprep.subr.bf16.mxu0 %v475
    %539 = vmatpush1.bf16.msra.mxu0 %v474
    %540 = vmatprep.subr.bf16.mxu0 %v477
    %541 = vmatpush1.bf16.msra.mxu0 %v476
    %542 = vmatprep.subr.bf16.mxu0 %v479
    %543 = vmatpush1.bf16.msra.mxu0 %v478
    %544 = vmatprep.subr.bf16.mxu0 %v481
    %545 = vmatpush1.bf16.msra.mxu0 %v480
    %546 = vmatprep.subr.bf16.mxu0 %v483
    %547 = vmatpush1.bf16.msra.mxu0 %v482
    %548 = vmatprep.subr.bf16.mxu0 %v485
    %549 = vmatpush1.bf16.msra.mxu0 %v484
    %550 = vmatprep.subr.bf16.mxu0 %v487
    %551 = vmatpush1.bf16.msra.mxu0 %v486
    %552 = vmatprep.subr.bf16.mxu0 %v489
    %553 = vmatpush1.bf16.msra.mxu0 %v488
    %554 = vmatprep.subr.bf16.mxu0 %v491
    %555 = vmatpush1.bf16.msra.mxu0 %v490
    %556 = vmatprep.subr.bf16.mxu0 %v493
    %557 = vmatpush1.bf16.msra.mxu0 %v492
    %558 = vmatprep.subr.bf16.mxu0 %v495
    %559 = vmatpush1.bf16.msra.mxu0 %v494
    %560 = vmatprep.subr.bf16.mxu0 %v497
    %561 = vmatpush1.bf16.msra.mxu0 %v496
    %562 = vmatprep.subr.bf16.mxu0 %v499
    %563 = vmatpush1.bf16.msra.mxu0 %v498
    %564 = vmatprep.mubr.bf16.mxu0 %v327
    %565 = vmatmul.mubr.bf16.gmra.mrb[0].mxu0 %v326
    %v566 = vpop.f32.mrb[0].mxu0
    %v567 = vadd.f32 %v365, %v566
    %v568 = vpop.f32.mrb[0].mxu0
    %v569 = vadd.f32 %v369, %v568
    %v570 = vpop.f32.mrb[0].mxu0
    %v571 = vpop.f32.mrb[0].mxu0
    %572 = vdwg.mxu0
    %v573 = vmax.f32 %v567, 0.0
    %v574 = vmax.f32 %v569, 0.0
    %v575 = vpack.c.bf16 %v573, %v573
    %v576 = vpack.c.bf16 %v574, %v574
    %v577 = vld [vmem:[#allocation5] sm:$0xff]
    %v578 = vld [vmem:[#allocation5 + $0x8] sm:$0xff]
    %v579 = vld [vmem:[#allocation5 + $0x10] sm:$0xff]
    %v580 = vld [vmem:[#allocation5 + $0x18] sm:$0xff]
    %v581 = vld [vmem:[#allocation5 + $0x20] sm:$0xff]
    %v582 = vld [vmem:[#allocation5 + $0x28] sm:$0xff]
    %v583 = vld [vmem:[#allocation5 + $0x30] sm:$0xff]
    %v584 = vld [vmem:[#allocation5 + $0x38] sm:$0xff]
    %v585 = vld [vmem:[#allocation5 + $0x40] sm:$0xff]
    %v586 = vld [vmem:[#allocation5 + $0x48] sm:$0xff]
    %v587 = vld [vmem:[#allocation5 + $0x50] sm:$0xff]
    %v588 = vld [vmem:[#allocation5 + $0x58] sm:$0xff]
    %v589 = vld [vmem:[#allocation5 + $0x60] sm:$0xff]
    %v590 = vld [vmem:[#allocation5 + $0x68] sm:$0xff]
    %v591 = vld [vmem:[#allocation5 + $0x70] sm:$0xff]
    %v592 = vld [vmem:[#allocation5 + $0x78] sm:$0xff]
    %v593 = vld [vmem:[#allocation5 + $0x80] sm:$0xff]
    %v594 = vld [vmem:[#allocation5 + $0x88] sm:$0xff]
    %v595 = vld [vmem:[#allocation5 + $0x90] sm:$0xff]
    %v596 = vld [vmem:[#allocation5 + $0x98] sm:$0xff]
    %v597 = vld [vmem:[#allocation5 + $0xa0] sm:$0xff]
    %v598 = vld [vmem:[#allocation5 + $0xa8] sm:$0xff]
    %v599 = vld [vmem:[#allocation5 + $0xb0] sm:$0xff]
    %v600 = vld [vmem:[#allocation5 + $0xb8] sm:$0xff]
    %v601 = vld [vmem:[#allocation5 + $0xc0] sm:$0xff]
    %v602 = vld [vmem:[#allocation5 + $0xc8] sm:$0xff]
    %v603 = vld [vmem:[#allocation5 + $0xd0] sm:$0xff]
    %v604 = vld [vmem:[#allocation5 + $0xd8] sm:$0xff]
    %v605 = vld [vmem:[#allocation5 + $0xe0] sm:$0xff]
    %v606 = vld [vmem:[#allocation5 + $0xe8] sm:$0xff]
    %v607 = vld [vmem:[#allocation5 + $0xf0] sm:$0xff]
    %v608 = vld [vmem:[#allocation5 + $0xf8] sm:$0xff]
    %v609 = vld [vmem:[%s8] sm:$0x3]
    %v611 = vlaneseq
    %v612 = vshrl.u32 %v611, 7
    %v613 = vsub.s32 0, %v612
    %v614 = vrot.slane %v609, %v613
    %v615 = vlaneseq
    %v616 = vshrl.u32 %v615, 7
    %v617 = vsub.s32 1, %v616
    %v618 = vrot.slane %v609, %v617
    %v653 = vunpack.c.l.b16 %v577
    %v654 = vunpack.c.h.b16 %v577
    %v655 = vunpack.c.l.b16 %v578
    %v656 = vunpack.c.h.b16 %v578
    %v657 = vunpack.c.l.b16 %v579
    %v658 = vunpack.c.h.b16 %v579
    %v659 = vunpack.c.l.b16 %v580
    %v660 = vunpack.c.h.b16 %v580
    %v661 = vunpack.c.l.b16 %v581
    %v662 = vunpack.c.h.b16 %v581
    %v663 = vunpack.c.l.b16 %v582
    %v664 = vunpack.c.h.b16 %v582
    %v665 = vunpack.c.l.b16 %v583
    %v666 = vunpack.c.h.b16 %v583
    %v667 = vunpack.c.l.b16 %v584
    %v668 = vunpack.c.h.b16 %v584
    %v669 = vunpack.c.l.b16 %v585
    %v670 = vunpack.c.h.b16 %v585
    %v671 = vunpack.c.l.b16 %v586
    %v672 = vunpack.c.h.b16 %v586
    %v673 = vunpack.c.l.b16 %v587
    %v674 = vunpack.c.h.b16 %v587
    %v675 = vunpack.c.l.b16 %v588
    %v676 = vunpack.c.h.b16 %v588
    %v677 = vunpack.c.l.b16 %v589
    %v678 = vunpack.c.h.b16 %v589
    %v679 = vunpack.c.l.b16 %v590
    %v680 = vunpack.c.h.b16 %v590
    %v681 = vunpack.c.l.b16 %v591
    %v682 = vunpack.c.h.b16 %v591
    %v683 = vunpack.c.l.b16 %v592
    %v684 = vunpack.c.h.b16 %v592
    %v685 = vunpack.c.l.b16 %v593
    %v686 = vunpack.c.h.b16 %v593
    %v687 = vunpack.c.l.b16 %v594
    %v688 = vunpack.c.h.b16 %v594
    %v689 = vunpack.c.l.b16 %v595
    %v690 = vunpack.c.h.b16 %v595
    %v691 = vunpack.c.l.b16 %v596
    %v692 = vunpack.c.h.b16 %v596
    %v693 = vunpack.c.l.b16 %v597
    %v694 = vunpack.c.h.b16 %v597
    %v695 = vunpack.c.l.b16 %v598
    %v696 = vunpack.c.h.b16 %v598
    %v697 = vunpack.c.l.b16 %v599
    %v698 = vunpack.c.h.b16 %v599
    %v699 = vunpack.c.l.b16 %v600
    %v700 = vunpack.c.h.b16 %v600
    %v701 = vunpack.c.l.b16 %v601
    %v702 = vunpack.c.h.b16 %v601
    %v703 = vunpack.c.l.b16 %v602
    %v704 = vunpack.c.h.b16 %v602
    %v705 = vunpack.c.l.b16 %v603
    %v706 = vunpack.c.h.b16 %v603
    %v707 = vunpack.c.l.b16 %v604
    %v708 = vunpack.c.h.b16 %v604
    %v709 = vunpack.c.l.b16 %v605
    %v710 = vunpack.c.h.b16 %v605
    %v711 = vunpack.c.l.b16 %v606
    %v712 = vunpack.c.h.b16 %v606
    %v713 = vunpack.c.l.b16 %v607
    %v714 = vunpack.c.h.b16 %v607
    %v715 = vunpack.c.l.b16 %v608
    %v716 = vunpack.c.h.b16 %v608
    %v717 = vpack.c.b16 %v655, %v653
    %v718 = vpack.c.b16 %v656, %v654
    %v719 = vpack.c.b16 %v659, %v657
    %v720 = vpack.c.b16 %v660, %v658
    %v721 = vpack.c.b16 %v663, %v661
    %v722 = vpack.c.b16 %v664, %v662
    %v723 = vpack.c.b16 %v667, %v665
    %v724 = vpack.c.b16 %v668, %v666
    %v725 = vpack.c.b16 %v671, %v669
    %v726 = vpack.c.b16 %v672, %v670
    %v727 = vpack.c.b16 %v675, %v673
    %v728 = vpack.c.b16 %v676, %v674
    %v729 = vpack.c.b16 %v679, %v677
    %v730 = vpack.c.b16 %v680, %v678
    %v731 = vpack.c.b16 %v683, %v681
    %v732 = vpack.c.b16 %v684, %v682
    %v733 = vpack.c.b16 %v687, %v685
    %v734 = vpack.c.b16 %v688, %v686
    %v735 = vpack.c.b16 %v691, %v689
    %v736 = vpack.c.b16 %v692, %v690
    %v737 = vpack.c.b16 %v695, %v693
    %v738 = vpack.c.b16 %v696, %v694
    %v739 = vpack.c.b16 %v699, %v697
    %v740 = vpack.c.b16 %v700, %v698
    %v741 = vpack.c.b16 %v703, %v701
    %v742 = vpack.c.b16 %v704, %v702
    %v743 = vpack.c.b16 %v707, %v705
    %v744 = vpack.c.b16 %v708, %v706
    %v745 = vpack.c.b16 %v711, %v709
    %v746 = vpack.c.b16 %v712, %v710
    %v747 = vpack.c.b16 %v715, %v713
    %v748 = vpack.c.b16 %v716, %v714
    %781 = vmatprep.subr.bf16.mxu0 %v718
    %782 = vmatpush1.bf16.msra.mxu0 %v717
    %783 = vmatprep.subr.bf16.mxu0 %v720
    %784 = vmatpush1.bf16.msra.mxu0 %v719
    %785 = vmatprep.subr.bf16.mxu0 %v722
    %786 = vmatpush1.bf16.msra.mxu0 %v721
    %787 = vmatprep.subr.bf16.mxu0 %v724
    %788 = vmatpush1.bf16.msra.mxu0 %v723
    %789 = vmatprep.subr.bf16.mxu0 %v726
    %790 = vmatpush1.bf16.msra.mxu0 %v725
    %791 = vmatprep.subr.bf16.mxu0 %v728
    %792 = vmatpush1.bf16.msra.mxu0 %v727
    %793 = vmatprep.subr.bf16.mxu0 %v730
    %794 = vmatpush1.bf16.msra.mxu0 %v729
    %795 = vmatprep.subr.bf16.mxu0 %v732
    %796 = vmatpush1.bf16.msra.mxu0 %v731
    %797 = vmatprep.subr.bf16.mxu0 %v734
    %798 = vmatpush1.bf16.msra.mxu0 %v733
    %799 = vmatprep.subr.bf16.mxu0 %v736
    %800 = vmatpush1.bf16.msra.mxu0 %v735
    %801 = vmatprep.subr.bf16.mxu0 %v738
    %802 = vmatpush1.bf16.msra.mxu0 %v737
    %803 = vmatprep.subr.bf16.mxu0 %v740
    %804 = vmatpush1.bf16.msra.mxu0 %v739
    %805 = vmatprep.subr.bf16.mxu0 %v742
    %806 = vmatpush1.bf16.msra.mxu0 %v741
    %807 = vmatprep.subr.bf16.mxu0 %v744
    %808 = vmatpush1.bf16.msra.mxu0 %v743
    %809 = vmatprep.subr.bf16.mxu0 %v746
    %810 = vmatpush1.bf16.msra.mxu0 %v745
    %811 = vmatprep.subr.bf16.mxu0 %v748
    %812 = vmatpush1.bf16.msra.mxu0 %v747
    %813 = vmatprep.mubr.bf16.mxu0 %v576
    %814 = vmatmul.mubr.bf16.gmra.mrb[0].mxu0 %v575
    %v815 = vpop.f32.mrb[0].mxu0
    %v816 = vadd.f32 %v614, %v815
    %v817 = vpop.f32.mrb[0].mxu0
    %v818 = vadd.f32 %v618, %v817
    %v819 = vpop.f32.mrb[0].mxu0
    %v820 = vpop.f32.mrb[0].mxu0
    %821 = vdwg.mxu0
    %v822 = vmax.f32 %v816, 0.0
    %v823 = vmax.f32 %v818, 0.0
    %v824 = vpack.c.bf16 %v822, %v822
    %v825 = vpack.c.bf16 %v823, %v823
    %v826 = vld [vmem:[#allocation7] sm:$0xff]
    %v827 = vld [vmem:[#allocation7 + $0x8] sm:$0xff]
    %v828 = vld [vmem:[#allocation7 + $0x10] sm:$0xff]
    %v829 = vld [vmem:[#allocation7 + $0x18] sm:$0xff]
    %v830 = vld [vmem:[#allocation7 + $0x20] sm:$0xff]
    %v831 = vld [vmem:[#allocation7 + $0x28] sm:$0xff]
    %v832 = vld [vmem:[#allocation7 + $0x30] sm:$0xff]
    %v833 = vld [vmem:[#allocation7 + $0x38] sm:$0xff]
    %v834 = vld [vmem:[#allocation7 + $0x40] sm:$0xff]
    %v835 = vld [vmem:[#allocation7 + $0x48] sm:$0xff]
    %v836 = vld [vmem:[#allocation7 + $0x50] sm:$0xff]
    %v837 = vld [vmem:[#allocation7 + $0x58] sm:$0xff]
    %v838 = vld [vmem:[#allocation7 + $0x60] sm:$0xff]
    %v839 = vld [vmem:[#allocation7 + $0x68] sm:$0xff]
    %v840 = vld [vmem:[#allocation7 + $0x70] sm:$0xff]
    %v841 = vld [vmem:[#allocation7 + $0x78] sm:$0xff]
    %v842 = vld [vmem:[#allocation7 + $0x80] sm:$0xff]
    %v843 = vld [vmem:[#allocation7 + $0x88] sm:$0xff]
    %v844 = vld [vmem:[#allocation7 + $0x90] sm:$0xff]
    %v845 = vld [vmem:[#allocation7 + $0x98] sm:$0xff]
    %v846 = vld [vmem:[#allocation7 + $0xa0] sm:$0xff]
    %v847 = vld [vmem:[#allocation7 + $0xa8] sm:$0xff]
    %v848 = vld [vmem:[#allocation7 + $0xb0] sm:$0xff]
    %v849 = vld [vmem:[#allocation7 + $0xb8] sm:$0xff]
    %v850 = vld [vmem:[#allocation7 + $0xc0] sm:$0xff]
    %v851 = vld [vmem:[#allocation7 + $0xc8] sm:$0xff]
    %v852 = vld [vmem:[#allocation7 + $0xd0] sm:$0xff]
    %v853 = vld [vmem:[#allocation7 + $0xd8] sm:$0xff]
    %v854 = vld [vmem:[#allocation7 + $0xe0] sm:$0xff]
    %v855 = vld [vmem:[#allocation7 + $0xe8] sm:$0xff]
    %v856 = vld [vmem:[#allocation7 + $0xf0] sm:$0xff]
    %v857 = vld [vmem:[#allocation7 + $0xf8] sm:$0xff]
    %v858 = vld [vmem:[%s10] sm:$0x3]
    %v860 = vlaneseq
    %v861 = vshrl.u32 %v860, 7
    %v862 = vsub.s32 0, %v861
    %v863 = vrot.slane %v858, %v862
    %v864 = vlaneseq
    %v865 = vshrl.u32 %v864, 7
    %v866 = vsub.s32 1, %v865
    %v867 = vrot.slane %v858, %v866
    %v902 = vunpack.c.l.b16 %v826
    %v903 = vunpack.c.h.b16 %v826
    %v904 = vunpack.c.l.b16 %v827
    %v905 = vunpack.c.h.b16 %v827
    %v906 = vunpack.c.l.b16 %v828
    %v907 = vunpack.c.h.b16 %v828
    %v908 = vunpack.c.l.b16 %v829
    %v909 = vunpack.c.h.b16 %v829
    %v910 = vunpack.c.l.b16 %v830
    %v911 = vunpack.c.h.b16 %v830
    %v912 = vunpack.c.l.b16 %v831
    %v913 = vunpack.c.h.b16 %v831
    %v914 = vunpack.c.l.b16 %v832
    %v915 = vunpack.c.h.b16 %v832
    %v916 = vunpack.c.l.b16 %v833
    %v917 = vunpack.c.h.b16 %v833
    %v918 = vunpack.c.l.b16 %v834
    %v919 = vunpack.c.h.b16 %v834
    %v920 = vunpack.c.l.b16 %v835
    %v921 = vunpack.c.h.b16 %v835
    %v922 = vunpack.c.l.b16 %v836
    %v923 = vunpack.c.h.b16 %v836
    %v924 = vunpack.c.l.b16 %v837
    %v925 = vunpack.c.h.b16 %v837
    %v926 = vunpack.c.l.b16 %v838
    %v927 = vunpack.c.h.b16 %v838
    %v928 = vunpack.c.l.b16 %v839
    %v929 = vunpack.c.h.b16 %v839
    %v930 = vunpack.c.l.b16 %v840
    %v931 = vunpack.c.h.b16 %v840
    %v932 = vunpack.c.l.b16 %v841
    %v933 = vunpack.c.h.b16 %v841
    %v934 = vunpack.c.l.b16 %v842
    %v935 = vunpack.c.h.b16 %v842
    %v936 = vunpack.c.l.b16 %v843
    %v937 = vunpack.c.h.b16 %v843
    %v938 = vunpack.c.l.b16 %v844
    %v939 = vunpack.c.h.b16 %v844
    %v940 = vunpack.c.l.b16 %v845
    %v941 = vunpack.c.h.b16 %v845
    %v942 = vunpack.c.l.b16 %v846
    %v943 = vunpack.c.h.b16 %v846
    %v944 = vunpack.c.l.b16 %v847
    %v945 = vunpack.c.h.b16 %v847
    %v946 = vunpack.c.l.b16 %v848
    %v947 = vunpack.c.h.b16 %v848
    %v948 = vunpack.c.l.b16 %v849
    %v949 = vunpack.c.h.b16 %v849
    %v950 = vunpack.c.l.b16 %v850
    %v951 = vunpack.c.h.b16 %v850
    %v952 = vunpack.c.l.b16 %v851
    %v953 = vunpack.c.h.b16 %v851
    %v954 = vunpack.c.l.b16 %v852
    %v955 = vunpack.c.h.b16 %v852
    %v956 = vunpack.c.l.b16 %v853
    %v957 = vunpack.c.h.b16 %v853
    %v958 = vunpack.c.l.b16 %v854
    %v959 = vunpack.c.h.b16 %v854
    %v960 = vunpack.c.l.b16 %v855
    %v961 = vunpack.c.h.b16 %v855
    %v962 = vunpack.c.l.b16 %v856
    %v963 = vunpack.c.h.b16 %v856
    %v964 = vunpack.c.l.b16 %v857
    %v965 = vunpack.c.h.b16 %v857
    %v966 = vpack.c.b16 %v904, %v902
    %v967 = vpack.c.b16 %v905, %v903
    %v968 = vpack.c.b16 %v908, %v906
    %v969 = vpack.c.b16 %v909, %v907
    %v970 = vpack.c.b16 %v912, %v910
    %v971 = vpack.c.b16 %v913, %v911
    %v972 = vpack.c.b16 %v916, %v914
    %v973 = vpack.c.b16 %v917, %v915
    %v974 = vpack.c.b16 %v920, %v918
    %v975 = vpack.c.b16 %v921, %v919
    %v976 = vpack.c.b16 %v924, %v922
    %v977 = vpack.c.b16 %v925, %v923
    %v978 = vpack.c.b16 %v928, %v926
    %v979 = vpack.c.b16 %v929, %v927
    %v980 = vpack.c.b16 %v932, %v930
    %v981 = vpack.c.b16 %v933, %v931
    %v982 = vpack.c.b16 %v936, %v934
    %v983 = vpack.c.b16 %v937, %v935
    %v984 = vpack.c.b16 %v940, %v938
    %v985 = vpack.c.b16 %v941, %v939
    %v986 = vpack.c.b16 %v944, %v942
    %v987 = vpack.c.b16 %v945, %v943
    %v988 = vpack.c.b16 %v948, %v946
    %v989 = vpack.c.b16 %v949, %v947
    %v990 = vpack.c.b16 %v952, %v950
    %v991 = vpack.c.b16 %v953, %v951
    %v992 = vpack.c.b16 %v956, %v954
    %v993 = vpack.c.b16 %v957, %v955
    %v994 = vpack.c.b16 %v960, %v958
    %v995 = vpack.c.b16 %v961, %v959
    %v996 = vpack.c.b16 %v964, %v962
    %v997 = vpack.c.b16 %v965, %v963
    %1030 = vmatprep.subr.bf16.mxu0 %v967
    %1031 = vmatpush1.bf16.msra.mxu0 %v966
    %1032 = vmatprep.subr.bf16.mxu0 %v969
    %1033 = vmatpush1.bf16.msra.mxu0 %v968
    %1034 = vmatprep.subr.bf16.mxu0 %v971
    %1035 = vmatpush1.bf16.msra.mxu0 %v970
    %1036 = vmatprep.subr.bf16.mxu0 %v973
    %1037 = vmatpush1.bf16.msra.mxu0 %v972
    %1038 = vmatprep.subr.bf16.mxu0 %v975
    %1039 = vmatpush1.bf16.msra.mxu0 %v974
    %1040 = vmatprep.subr.bf16.mxu0 %v977
    %1041 = vmatpush1.bf16.msra.mxu0 %v976
    %1042 = vmatprep.subr.bf16.mxu0 %v979
    %1043 = vmatpush1.bf16.msra.mxu0 %v978
    %1044 = vmatprep.subr.bf16.mxu0 %v981
    %1045 = vmatpush1.bf16.msra.mxu0 %v980
    %1046 = vmatprep.subr.bf16.mxu0 %v983
    %1047 = vmatpush1.bf16.msra.mxu0 %v982
    %1048 = vmatprep.subr.bf16.mxu0 %v985
    %1049 = vmatpush1.bf16.msra.mxu0 %v984
    %1050 = vmatprep.subr.bf16.mxu0 %v987
    %1051 = vmatpush1.bf16.msra.mxu0 %v986
    %1052 = vmatprep.subr.bf16.mxu0 %v989
    %1053 = vmatpush1.bf16.msra.mxu0 %v988
    %1054 = vmatprep.subr.bf16.mxu0 %v991
    %1055 = vmatpush1.bf16.msra.mxu0 %v990
    %1056 = vmatprep.subr.bf16.mxu0 %v993
    %1057 = vmatpush1.bf16.msra.mxu0 %v992
    %1058 = vmatprep.subr.bf16.mxu0 %v995
    %1059 = vmatpush1.bf16.msra.mxu0 %v994
    %1060 = vmatprep.subr.bf16.mxu0 %v997
    %1061 = vmatpush1.bf16.msra.mxu0 %v996
    %1062 = vmatprep.mubr.bf16.mxu0 %v825
    %1063 = vmatmul.mubr.bf16.gmra.mrb[0].mxu0 %v824
    %v1064 = vpop.f32.mrb[0].mxu0
    %v1065 = vadd.f32 %v863, %v1064
    %v1066 = vpop.f32.mrb[0].mxu0
    %v1067 = vadd.f32 %v867, %v1066
    %v1068 = vpop.f32.mrb[0].mxu0
    %v1069 = vpop.f32.mrb[0].mxu0
    %1070 = vdwg.mxu0
    %v1071 = vmax.f32 %v1065, 0.0
    %v1072 = vmax.f32 %v1067, 0.0
    %v1073 = vpack.c.bf16 %v1071, %v1071
    %v1074 = vpack.c.bf16 %v1072, %v1072
    %v1075 = vld [vmem:[%s11] sm:$0xf]
    %v1076 = vld [vmem:[%s11 + $0x4] sm:$0xf]
    %v1077 = vld [vmem:[%s11 + $0x8] sm:$0xf]
    %v1078 = vld [vmem:[%s11 + $0xc] sm:$0xf]
    %v1079 = vld [vmem:[%s11 + $0x10] sm:$0xf]
    %v1080 = vld [vmem:[%s11 + $0x14] sm:$0xf]
    %v1081 = vld [vmem:[%s11 + $0x18] sm:$0xf]
    %v1082 = vld [vmem:[%s11 + $0x1c] sm:$0xf]
    %v1083 = vld [vmem:[%s11 + $0x20] sm:$0xf]
    %v1084 = vld [vmem:[%s11 + $0x24] sm:$0xf]
    %v1085 = vld [vmem:[%s11 + $0x28] sm:$0xf]
    %v1086 = vld [vmem:[%s11 + $0x2c] sm:$0xf]
    %v1087 = vld [vmem:[%s11 + $0x30] sm:$0xf]
    %v1088 = vld [vmem:[%s11 + $0x34] sm:$0xf]
    %v1089 = vld [vmem:[%s11 + $0x38] sm:$0xf]
    %v1090 = vld [vmem:[%s11 + $0x3c] sm:$0xf]
    %v1091 = vld [vmem:[%s11 + $0x40] sm:$0xf]
    %v1092 = vld [vmem:[%s11 + $0x44] sm:$0xf]
    %v1093 = vld [vmem:[%s11 + $0x48] sm:$0xf]
    %v1094 = vld [vmem:[%s11 + $0x4c] sm:$0xf]
    %v1095 = vld [vmem:[%s11 + $0x50] sm:$0xf]
    %v1096 = vld [vmem:[%s11 + $0x54] sm:$0xf]
    %v1097 = vld [vmem:[%s11 + $0x58] sm:$0xf]
    %v1098 = vld [vmem:[%s11 + $0x5c] sm:$0xf]
    %v1099 = vld [vmem:[%s11 + $0x60] sm:$0xf]
    %v1100 = vld [vmem:[%s11 + $0x64] sm:$0xf]
    %v1101 = vld [vmem:[%s11 + $0x68] sm:$0xf]
    %v1102 = vld [vmem:[%s11 + $0x6c] sm:$0xf]
    %v1103 = vld [vmem:[%s11 + $0x70] sm:$0xf]
    %v1104 = vld [vmem:[%s11 + $0x74] sm:$0xf]
    %v1105 = vld [vmem:[%s11 + $0x78] sm:$0xf]
    %v1106 = vld [vmem:[%s11 + $0x7c] sm:$0xf]
    %v1107 = vld [vmem:[%s12] sm:$0x1]
    %v1109 = vlaneseq
    %v1110 = vshrl.u32 %v1109, 7
    %v1111 = vsub.s32 0, %v1110
    %v1112 = vrot.slane %v1107, %v1111
    %v1146 = vunpack.c.l.b16 %v1075
    %v1147 = vunpack.c.l.b16 %v1076
    %v1148 = vunpack.c.l.b16 %v1077
    %v1149 = vunpack.c.l.b16 %v1078
    %v1150 = vunpack.c.l.b16 %v1079
    %v1151 = vunpack.c.l.b16 %v1080
    %v1152 = vunpack.c.l.b16 %v1081
    %v1153 = vunpack.c.l.b16 %v1082
    %v1154 = vunpack.c.l.b16 %v1083
    %v1155 = vunpack.c.l.b16 %v1084
    %v1156 = vunpack.c.l.b16 %v1085
    %v1157 = vunpack.c.l.b16 %v1086
    %v1158 = vunpack.c.l.b16 %v1087
    %v1159 = vunpack.c.l.b16 %v1088
    %v1160 = vunpack.c.l.b16 %v1089
    %v1161 = vunpack.c.l.b16 %v1090
    %v1162 = vunpack.c.l.b16 %v1091
    %v1163 = vunpack.c.l.b16 %v1092
    %v1164 = vunpack.c.l.b16 %v1093
    %v1165 = vunpack.c.l.b16 %v1094
    %v1166 = vunpack.c.l.b16 %v1095
    %v1167 = vunpack.c.l.b16 %v1096
    %v1168 = vunpack.c.l.b16 %v1097
    %v1169 = vunpack.c.l.b16 %v1098
    %v1170 = vunpack.c.l.b16 %v1099
    %v1171 = vunpack.c.l.b16 %v1100
    %v1172 = vunpack.c.l.b16 %v1101
    %v1173 = vunpack.c.l.b16 %v1102
    %v1174 = vunpack.c.l.b16 %v1103
    %v1175 = vunpack.c.l.b16 %v1104
    %v1176 = vunpack.c.l.b16 %v1105
    %v1177 = vunpack.c.l.b16 %v1106
    %v1178 = vpack.c.b16 %v1147, %v1146
    %v1179 = vpack.c.b16 %v1149, %v1148
    %v1180 = vpack.c.b16 %v1151, %v1150
    %v1181 = vpack.c.b16 %v1153, %v1152
    %v1182 = vpack.c.b16 %v1155, %v1154
    %v1183 = vpack.c.b16 %v1157, %v1156
    %v1184 = vpack.c.b16 %v1159, %v1158
    %v1185 = vpack.c.b16 %v1161, %v1160
    %v1186 = vpack.c.b16 %v1163, %v1162
    %v1187 = vpack.c.b16 %v1165, %v1164
    %v1188 = vpack.c.b16 %v1167, %v1166
    %v1189 = vpack.c.b16 %v1169, %v1168
    %v1190 = vpack.c.b16 %v1171, %v1170
    %v1191 = vpack.c.b16 %v1173, %v1172
    %v1192 = vpack.c.b16 %v1175, %v1174
    %v1193 = vpack.c.b16 %v1177, %v1176
    %1210 = vmatprep.subr.bf16.mxu0 0
    %1211 = vmatpush1.bf16.msra.mxu0 %v1178
    %1212 = vmatprep.subr.bf16.mxu0 0
    %1213 = vmatpush1.bf16.msra.mxu0 %v1179
    %1214 = vmatprep.subr.bf16.mxu0 0
    %1215 = vmatpush1.bf16.msra.mxu0 %v1180
    %1216 = vmatprep.subr.bf16.mxu0 0
    %1217 = vmatpush1.bf16.msra.mxu0 %v1181
    %1218 = vmatprep.subr.bf16.mxu0 0
    %1219 = vmatpush1.bf16.msra.mxu0 %v1182
    %1220 = vmatprep.subr.bf16.mxu0 0
    %1221 = vmatpush1.bf16.msra.mxu0 %v1183
    %1222 = vmatprep.subr.bf16.mxu0 0
    %1223 = vmatpush1.bf16.msra.mxu0 %v1184
    %1224 = vmatprep.subr.bf16.mxu0 0
    %1225 = vmatpush1.bf16.msra.mxu0 %v1185
    %1226 = vmatprep.subr.bf16.mxu0 0
    %1227 = vmatpush1.bf16.msra.mxu0 %v1186
    %1228 = vmatprep.subr.bf16.mxu0 0
    %1229 = vmatpush1.bf16.msra.mxu0 %v1187
    %1230 = vmatprep.subr.bf16.mxu0 0
    %1231 = vmatpush1.bf16.msra.mxu0 %v1188
    %1232 = vmatprep.subr.bf16.mxu0 0
    %1233 = vmatpush1.bf16.msra.mxu0 %v1189
    %1234 = vmatprep.subr.bf16.mxu0 0
    %1235 = vmatpush1.bf16.msra.mxu0 %v1190
    %1236 = vmatprep.subr.bf16.mxu0 0
    %1237 = vmatpush1.bf16.msra.mxu0 %v1191
    %1238 = vmatprep.subr.bf16.mxu0 0
    %1239 = vmatpush1.bf16.msra.mxu0 %v1192
    %1240 = vmatprep.subr.bf16.mxu0 0
    %1241 = vmatpush1.bf16.msra.mxu0 %v1193
    %1242 = vmatprep.mubr.bf16.mxu0 %v1074
    %1243 = vmatmul.mubr.bf16.gmra.mrb[0].mxu0 %v1073
    %v1244 = vpop.f32.mrb[0].mxu0
    %v1245 = vadd.f32 %v1112, %v1244
    %v1246 = vpop.f32.mrb[0].mxu0
    %v1247 = vpop.f32.mrb[0].mxu0
    %v1248 = vpop.f32.mrb[0].mxu0
    %1249 = vdwg.mxu0
    %v1250 = vmax.f32 %v1245, 0.0
    %v1251 = vld [vmem:[%s13] sm:$0x1]
    %v1253 = vlaneseq
    %v1254 = vshrl.u32 %v1253, 7
    %v1255 = vsub.s32 0, %v1254
    %v1256 = vrot.slane %v1251, %v1255
    %v1258 = vmul.f32 %v1250, %v1256
    %vm1259 = vcmask 261120
    %v1260 = vsel %vm1259, %v1258, 0.0
    %1261 = vadd.xlane.f32.xlu0 %v1260
    %v1262 = vpop.xlane.xlu0 %1261
    %v1263 = vld [vmem:[#allocation2] sm:$0x1]
    %v1265 = vlaneseq
    %v1266 = vshrl.u32 %v1265, 7
    %v1267 = vsub.s32 0, %v1266
    %v1268 = vrot.slane %v1263, %v1267
    %v1270 = vadd.f32 %v1262, %v1268
    %vm1271 = vcmask 7168
    %1272 = vst.msk [vmem:[%s15] sm:$0xff] %vm1271, %v1270
    // Predicated region
    $region74: #{tpu_custom_call.1} parent=1 // pred_check
      _
    $region75: #{tpu_custom_call.1} parent=1 // pred_check_branch
      %1274 = sbr.rel (0) target = $region77
    $region76: #{tpu_custom_call.1} parent=1 // pred_region
      _
    $region77: #{tpu_custom_call.1} parent=1 // pred_fallthru
      _
    // Predicated region
    $region78: #{tpu_custom_call.1} parent=1 // pred_check
      _
    $region79: #{tpu_custom_call.1} parent=1 // pred_check_branch
      %1276 = sbr.rel (0) target = $region81
    $region80: #{tpu_custom_call.1} parent=1 // pred_region
      _
    $region81: #{tpu_custom_call.1} parent=1 // pred_fallthru
      _
    %1277 = vsyncpa [#allocation4], 1
    %1278 = vsyncpa [#allocation6], 1

</llo_original>
